<compile_context>
chip_gen: v5e
topology: v5e:2x2
jax: 0.10.0
libtpu: 0.0.40
codegen_flags: <defaults>
</compile_context>

<pallas_src>
import jax
import jax.numpy as jnp
from jax import lax
from jax.experimental import pallas as pl
from jax.experimental.pallas import tpu as pltpu


def _fused_mlp_kernel(ids_ref, x_ref, tbl_ref, w1x_ref, w2_ref, b2_ref, o_ref):
    # ids_ref : int32 [TB, 2]        (home_id, away_id) for this batch tile
    # x_ref   : bf16  [TB, Dx]       x_other tile
    # tbl_ref : bf16  [2*NT, H]      [home_embed@w1_home + b1 ; away_embed@w1_away]
    # w1x_ref : bf16  [Dx, H]        x_other slice of w1          (resident)
    # w2_ref  : bf16  [H, O]         second Linear weight         (resident)
    # b2_ref  : f32   [1, O]         second Linear bias           (resident)
    # o_ref   : f32   [TB, O]
    ids = ids_ref[...]
    tb = ids_ref.shape[0]
    two_nt = tbl_ref.shape[0]
    nt = two_nt // 2

    # Single in-kernel embedding "gather" as a one-hot matmul on the MXU.
    # Home ids hit [0, NT), away ids (shifted by NT) hit [NT, 2*NT): exactly
    # two ones per row, so one dot sums both embedding contributions (and b1,
    # which was folded into the home half, is added exactly once).
    iota = lax.broadcasted_iota(jnp.int32, (tb, two_nt), 1)
    onehot = ((iota == ids[:, 0:1]) | (iota == ids[:, 1:2] + nt)).astype(tbl_ref.dtype)

    h = jnp.dot(onehot, tbl_ref[...], preferred_element_type=jnp.float32)
    h = h + jnp.dot(x_ref[...], w1x_ref[...], preferred_element_type=jnp.float32)
    h = jnp.maximum(h, 0.0)                      # ReLU
    # Dropout(p=0.2) -> identity (eval mode)

    out = jnp.dot(h.astype(w2_ref.dtype), w2_ref[...],
                  preferred_element_type=jnp.float32) + b2_ref[...]
    o_ref[...] = out.astype(o_ref.dtype)


def prepare_params(params):
    """One-time fold of the embedding tables into the first Linear (cache with params)."""
    home_w = params["home_embed"]          # [NT, emb] f32
    away_w = params["away_embed"]          # [NT, emb] f32
    w1, b1 = params["w1"], params["b1"]    # [F, H], [1, H]
    w2, b2 = params["w2"], params["b2"]    # [H, O], [1, O]

    NT, emb = home_w.shape
    home_tbl = home_w @ w1[:emb] + b1                  # b1 folded once (home half)
    away_tbl = away_w @ w1[emb:2 * emb]
    tbl = jnp.concatenate([home_tbl, away_tbl], axis=0).astype(jnp.bfloat16)  # [2*NT, H]

    return {
        "tbl": tbl,                                    # [2*NT, H] bf16
        "w1x": w1[2 * emb:].astype(jnp.bfloat16),      # [Dx, H]   bf16
        "w2": w2.astype(jnp.bfloat16),                 # [H, O]    bf16
        "b2": b2.astype(jnp.float32),                  # [1, O]    f32
    }


def _round_up(v, m):
    return ((v + m - 1) // m) * m


def goalsight_forward(x_teams, x_other, prepared, *, batch_tile=512):
    """Pallas-backed forward matching GoalSightWithEmbeddings.forward (eval mode)."""
    tbl = prepared["tbl"]
    w1x = prepared["w1x"]
    w2 = prepared["w2"]
    b2 = prepared["b2"]

    two_NT, H = tbl.shape
    Dx = x_other.shape[1]
    O = w2.shape[1]
    B = x_teams.shape[0]

    # --- Batch tiling: 16-aligned (bf16 sublane packing), >=2 grid steps when
    # B > 16 so the "parallel" axis shards across v7x's two TensorCores. ---
    n_tiles = max(1, pl.cdiv(B, batch_tile))
    if n_tiles == 1 and B > 16:
        n_tiles = 2
    TB = _round_up(pl.cdiv(B, n_tiles), 16)
    Bp = n_tiles * TB

    ids = x_teams.astype(jnp.int32)
    xo = x_other.astype(jnp.bfloat16)
    if Bp != B:
        ids = jnp.pad(ids, ((0, Bp - B), (0, 0)))   # id 0 is a valid team; rows sliced away
        xo = jnp.pad(xo, ((0, Bp - B), (0, 0)))

    grid = (n_tiles,)

    flops = 2 * Bp * (two_NT * H + Dx * H + H * O)
    bytes_accessed = (ids.size * 4 + xo.size * 2 + tbl.size * 2 +
                      w1x.size * 2 + w2.size * 2 + b2.size * 4 + Bp * O * 4)

    out = pl.pallas_call(
        _fused_mlp_kernel,
        out_shape=jax.ShapeDtypeStruct((Bp, O), jnp.float32),
        grid_spec=pl.GridSpec(
            grid=grid,
            in_specs=[
                pl.BlockSpec((TB, 2), lambda i: (i, 0)),        # team ids (batch-tiled)
                pl.BlockSpec((TB, Dx), lambda i: (i, 0)),       # x_other (batch-tiled)
                pl.BlockSpec((two_NT, H), lambda i: (0, 0)),    # stacked fused table (resident)
                pl.BlockSpec((Dx, H), lambda i: (0, 0)),        # w1 x_other slice (resident)
                pl.BlockSpec((H, O), lambda i: (0, 0)),         # w2 (resident)
                pl.BlockSpec((1, O), lambda i: (0, 0)),         # b2 (resident)
            ],
            # Narrow (TB, O) output: block last dim == full array dim is legal;
            # avoids the 32x f32 write amplification of padding O to 128.
            out_specs=pl.BlockSpec((TB, O), lambda i: (i, 0)),
        ),
        compiler_params=pltpu.CompilerParams(
            # "parallel" batch axis: shards across v7x's 2 TensorCores, no-op on v5e/v6e.
            dimension_semantics=("parallel",),
        ),
        cost_estimate=pl.CostEstimate(
            flops=int(flops), transcendentals=0, bytes_accessed=int(bytes_accessed)),
    )(ids, xo, tbl, w1x, w2, b2)

    return out[:B]


def init_params(key, num_teams, embedding_dim, input_dim, hidden_dim, output_dim):
    """Deterministic synthetic parameter init (shapes per module __init__)."""
    k = jax.random.split(key, 6)
    F = embedding_dim * 2 + input_dim
    params = {
        "home_embed": jax.random.normal(k[0], (num_teams, embedding_dim), jnp.float32),
        "away_embed": jax.random.normal(k[1], (num_teams, embedding_dim), jnp.float32),
        # PyTorch Linear weight is [out, in]; we store transposed [in, out].
        "w1": jax.random.normal(k[2], (F, hidden_dim), jnp.float32) * (1.0 / jnp.sqrt(F)),
        "b1": jax.random.normal(k[3], (1, hidden_dim), jnp.float32) * 0.01,
        "w2": jax.random.normal(k[4], (hidden_dim, output_dim), jnp.float32) * (1.0 / jnp.sqrt(hidden_dim)),
        "b2": jax.random.normal(k[5], (1, output_dim), jnp.float32) * 0.01,
    }
    return params


def _reference_forward(x_teams, x_other, params):
    """Pure-JAX f32 reference for correctness check."""
    home = jnp.take(params["home_embed"], x_teams[:, 0], axis=0)
    away = jnp.take(params["away_embed"], x_teams[:, 1], axis=0)
    x = jnp.concatenate([home, away, x_other], axis=1)
    h = jnp.maximum(x @ params["w1"] + params["b1"], 0.0)
    return h @ params["w2"] + params["b2"]


if __name__ == "__main__":
    # Small shapes consistent with the module.
    num_teams, embedding_dim, input_dim, hidden_dim, output_dim = 10, 8, 16, 32, 4

    key = jax.random.PRNGKey(0)
    kp, kt, kx, kt2, kx2 = jax.random.split(key, 5)
    params = init_params(kp, num_teams, embedding_dim, input_dim, hidden_dim, output_dim)
    prepared = prepare_params(params)   # one-time prepare, cached with params

    # Case 1: tiny batch (single grid step).
    batch = 8
    x_teams = jax.random.randint(kt, (batch, 2), 0, num_teams, dtype=jnp.int32)
    x_other = jax.random.normal(kx, (batch, input_dim), jnp.float32)
    out = jax.block_until_ready(goalsight_forward(x_teams, x_other, prepared))
    ref = _reference_forward(x_teams, x_other, params)
    assert out.shape == (batch, output_dim)
    max_err = float(jnp.max(jnp.abs(out - ref)))
    # bf16 MXU operands (f32 accumulate) -> loosened tolerance vs the pure-f32 reference.
    assert jnp.allclose(out, ref, atol=5e-2, rtol=5e-2), f"mismatch (max abs err {max_err})"

    # Case 2: mid batch exercising the >=2-step parallel grid + padded rows path.
    batch2 = 40
    x_teams2 = jax.random.randint(kt2, (batch2, 2), 0, num_teams, dtype=jnp.int32)
    x_other2 = jax.random.normal(kx2, (batch2, input_dim), jnp.float32)
    out2 = jax.block_until_ready(goalsight_forward(x_teams2, x_other2, prepared))
    ref2 = _reference_forward(x_teams2, x_other2, params)
    assert out2.shape == (batch2, output_dim)
    max_err2 = float(jnp.max(jnp.abs(out2 - ref2)))
    assert jnp.allclose(out2, ref2, atol=5e-2, rtol=5e-2), f"mismatch (max abs err {max_err2})"

    print("KERNEL_OK")
</pallas_src>

<mosaic_0001>
module attributes {stable_mosaic.version = 11 : i64} {
  func.func @_fused_mlp_kernel(%arg0: i32, %arg1: memref<16x2xi32, #tpu.memory_space<vmem>>, %arg2: memref<16x16xbf16, #tpu.memory_space<vmem>>, %arg3: memref<20x32xbf16, #tpu.memory_space<vmem>>, %arg4: memref<16x32xbf16, #tpu.memory_space<vmem>>, %arg5: memref<32x4xbf16, #tpu.memory_space<vmem>>, %arg6: memref<1x4xf32, #tpu.memory_space<vmem>>, %arg7: memref<16x4xf32, #tpu.memory_space<vmem>>) attributes {dimension_semantics = [#tpu.dimension_semantics<parallel>], iteration_bounds = array<i64: 1>, scalar_prefetch = 0 : i64, scratch_operands = 0 : i64, tpu.core_type = #tpu.core_type<tc>, window_params = [{transform_indices = @transform_0, window_bounds = array<i64: 16, 2>}, {transform_indices = @transform_1, window_bounds = array<i64: 16, 16>}, {pipeline_mode = #tpu.pipeline_mode<synchronous>, transform_indices = @transform_2, window_bounds = array<i64: 20, 32>}, {pipeline_mode = #tpu.pipeline_mode<synchronous>, transform_indices = @transform_3, window_bounds = array<i64: 16, 32>}, {pipeline_mode = #tpu.pipeline_mode<synchronous>, transform_indices = @transform_4, window_bounds = array<i64: 32, 4>}, {pipeline_mode = #tpu.pipeline_mode<synchronous>, transform_indices = @transform_5, window_bounds = array<i64: 1, 4>}, {transform_indices = @transform_6, window_bounds = array<i64: 16, 4>}]} {
    %c0 = arith.constant 0 : index
    %c0_0 = arith.constant 0 : index
    %0 = vector.load %arg1[%c0, %c0_0] : memref<16x2xi32, #tpu.memory_space<vmem>>, vector<16x2xi32>
    %1 = tpu.iota {dimensions = array<i32: 1>} : vector<16x20xi32>
    %2 = vector.extract_strided_slice %0 {offsets = [0, 0], sizes = [16, 1], strides = [1, 1]} : vector<16x2xi32> to vector<16x1xi32>
    %3 = vector.broadcast %2 : vector<16x1xi32> to vector<16x20xi32>
    %4 = arith.cmpi eq, %1, %3 : vector<16x20xi32>
    %5 = vector.extract_strided_slice %0 {offsets = [0, 1], sizes = [16, 1], strides = [1, 1]} : vector<16x2xi32> to vector<16x1xi32>
    %c10_i32 = arith.constant 10 : i32
    %6 = vector.broadcast %c10_i32 : i32 to vector<16x1xi32>
    %7 = arith.addi %5, %6 : vector<16x1xi32>
    %8 = vector.broadcast %7 : vector<16x1xi32> to vector<16x20xi32>
    %9 = arith.cmpi eq, %1, %8 : vector<16x20xi32>
    %10 = arith.ori %4, %9 : vector<16x20xi1>
    %11 = arith.extui %10 : vector<16x20xi1> to vector<16x20xi32>
    %12 = arith.sitofp %11 : vector<16x20xi32> to vector<16x20xf32>
    %13 = arith.truncf %12 : vector<16x20xf32> to vector<16x20xbf16>
    %c0_1 = arith.constant 0 : index
    %c0_2 = arith.constant 0 : index
    %14 = vector.load %arg3[%c0_1, %c0_2] : memref<20x32xbf16, #tpu.memory_space<vmem>>, vector<20x32xbf16>
    %cst = arith.constant dense<0.000000e+00> : vector<16x32xf32>
    %15 = tpu.matmul %13, %14, %cst {dimension_numbers = #tpu.dot_dimension_numbers<[1], [0], [0], [1], [0, 0, 1, 1], [], []>} : vector<16x20xbf16>, vector<20x32xbf16>, vector<16x32xf32> -> vector<16x32xf32>
    %c0_3 = arith.constant 0 : index
    %c0_4 = arith.constant 0 : index
    %16 = vector.load %arg2[%c0_3, %c0_4] : memref<16x16xbf16, #tpu.memory_space<vmem>>, vector<16x16xbf16>
    %c0_5 = arith.constant 0 : index
    %c0_6 = arith.constant 0 : index
    %17 = vector.load %arg4[%c0_5, %c0_6] : memref<16x32xbf16, #tpu.memory_space<vmem>>, vector<16x32xbf16>
    %cst_7 = arith.constant dense<0.000000e+00> : vector<16x32xf32>
    %18 = tpu.matmul %16, %17, %cst_7 {dimension_numbers = #tpu.dot_dimension_numbers<[1], [0], [0], [1], [0, 0, 1, 1], [], []>} : vector<16x16xbf16>, vector<16x32xbf16>, vector<16x32xf32> -> vector<16x32xf32>
    %19 = arith.addf %15, %18 : vector<16x32xf32>
    %cst_8 = arith.constant 0.000000e+00 : f32
    %20 = vector.broadcast %cst_8 : f32 to vector<16x32xf32>
    %21 = arith.maximumf %19, %20 : vector<16x32xf32>
    %22 = arith.truncf %21 : vector<16x32xf32> to vector<16x32xbf16>
    %c0_9 = arith.constant 0 : index
    %c0_10 = arith.constant 0 : index
    %23 = vector.load %arg5[%c0_9, %c0_10] : memref<32x4xbf16, #tpu.memory_space<vmem>>, vector<32x4xbf16>
    %cst_11 = arith.constant dense<0.000000e+00> : vector<16x4xf32>
    %24 = tpu.matmul %22, %23, %cst_11 {dimension_numbers = #tpu.dot_dimension_numbers<[1], [0], [0], [1], [0, 0, 1, 1], [], []>} : vector<16x32xbf16>, vector<32x4xbf16>, vector<16x4xf32> -> vector<16x4xf32>
    %c0_12 = arith.constant 0 : index
    %c0_13 = arith.constant 0 : index
    %25 = vector.load %arg6[%c0_12, %c0_13] : memref<1x4xf32, #tpu.memory_space<vmem>>, vector<1x4xf32>
    %26 = vector.broadcast %25 : vector<1x4xf32> to vector<16x4xf32>
    %27 = arith.addf %24, %26 : vector<16x4xf32>
    %c0_14 = arith.constant 0 : index
    %c0_15 = arith.constant 0 : index
    %28 = vector.load %arg7[%c0_14, %c0_15] : memref<16x4xf32, #tpu.memory_space<vmem>>, vector<16x4xf32>
    tpu.vector_store %arg7[%c0_14, %c0_15], %27 {strides = array<i32>} : memref<16x4xf32, #tpu.memory_space<vmem>>, vector<16x4xf32>,
    return
  }
  func.func @transform_0(%arg0: i32) -> (i32, i32) {
    %c0_i32 = arith.constant 0 : i32
    %c0_i32_0 = arith.constant 0 : i32
    return %arg0, %c0_i32 : i32, i32
  }
  func.func @transform_1(%arg0: i32) -> (i32, i32) {
    %c0_i32 = arith.constant 0 : i32
    %c0_i32_0 = arith.constant 0 : i32
    return %arg0, %c0_i32 : i32, i32
  }
  func.func @transform_2(%arg0: i32) -> (i32, i32) {
    %c0_i32 = arith.constant 0 : i32
    %c0_i32_0 = arith.constant 0 : i32
    %c0_i32_1 = arith.constant 0 : i32
    return %c0_i32, %c0_i32_0 : i32, i32
  }
  func.func @transform_3(%arg0: i32) -> (i32, i32) {
    %c0_i32 = arith.constant 0 : i32
    %c0_i32_0 = arith.constant 0 : i32
    %c0_i32_1 = arith.constant 0 : i32
    return %c0_i32, %c0_i32_0 : i32, i32
  }
  func.func @transform_4(%arg0: i32) -> (i32, i32) {
    %c0_i32 = arith.constant 0 : i32
    %c0_i32_0 = arith.constant 0 : i32
    %c0_i32_1 = arith.constant 0 : i32
    return %c0_i32, %c0_i32_0 : i32, i32
  }
  func.func @transform_5(%arg0: i32) -> (i32, i32) {
    %c0_i32 = arith.constant 0 : i32
    %c0_i32_0 = arith.constant 0 : i32
    %c0_i32_1 = arith.constant 0 : i32
    return %c0_i32, %c0_i32_0 : i32, i32
  }
  func.func @transform_6(%arg0: i32) -> (i32, i32) {
    %c0_i32 = arith.constant 0 : i32
    %c0_i32_0 = arith.constant 0 : i32
    return %arg0, %c0_i32 : i32, i32
  }
}

</mosaic_0001>

<llo_original>
// kernel: tpu_custom_call.1
$region0: #{tpu_custom_call.1}
  #allocation0 [shape = 'u32[]', space=smem, size = 0x4, offset = 0x4, fixed_abs, tag = 'smem constant byte address 0x4 - core index']
  #allocation1 [shape = 'u32[72,128]{1,0:T(1,128)}', space=vmem, size = 0x9000, scoped, tag = 'internal scratch']
  %s0 = inlined_call_operand.vmem [shape: s32[16,2], index: 0, kind: input, shape index: {}]
  %s1 = inlined_call_operand.vmem [shape: bf16[16,16], index: 1, kind: input, shape index: {}]
  %s2 = inlined_call_operand.vmem [shape: bf16[20,32], index: 2, kind: input, shape index: {}]
  %s3 = inlined_call_operand.vmem [shape: bf16[16,32], index: 3, kind: input, shape index: {}]
  %s4 = inlined_call_operand.vmem [shape: bf16[32,4], index: 4, kind: input, shape index: {}]
  %s5 = inlined_call_operand.vmem [shape: f32[1,4], index: 5, kind: input, shape index: {}]
  %s6 = inlined_call_operand.vmem [shape: f32[16,4], index: 6, kind: output, shape index: {}]
  %s7 = sld [smem:[#allocation0]]
  $region34: #{tpu_custom_call.1} parent=0
    _
  %s9 = ssub.s32 1, %s7
  %s10 = scalar_select 0, %s9, %s7
  // Predicated region
  $region2: #{tpu_custom_call.1} parent=0 // pred_check
    _
  $region3: #{tpu_custom_call.1} parent=0 // pred_check_branch
    %12 = sbr.rel (0) target = $region5
  $region4: #{tpu_custom_call.1} parent=0 // pred_region
    _
  $region5: #{tpu_custom_call.1} parent=0 // pred_fallthru
    _
  // Predicated region
  $region6: #{tpu_custom_call.1} parent=0 // pred_check
    _
  $region7: #{tpu_custom_call.1} parent=0 // pred_check_branch
    %14 = sbr.rel (0) target = $region9
  $region8: #{tpu_custom_call.1} parent=0 // pred_region
    _
  $region9: #{tpu_custom_call.1} parent=0 // pred_fallthru
    _
  // Predicated region
  $region10: #{tpu_custom_call.1} parent=0 // pred_check
    _
  $region11: #{tpu_custom_call.1} parent=0 // pred_check_branch
    %16 = sbr.rel (0) target = $region13
  $region12: #{tpu_custom_call.1} parent=0 // pred_region
    _
  $region13: #{tpu_custom_call.1} parent=0 // pred_fallthru
    _
  // Predicated region
  $region14: #{tpu_custom_call.1} parent=0 // pred_check
    _
  $region15: #{tpu_custom_call.1} parent=0 // pred_check_branch
    %18 = sbr.rel (0) target = $region17
  $region16: #{tpu_custom_call.1} parent=0 // pred_region
    _
  $region17: #{tpu_custom_call.1} parent=0 // pred_fallthru
    _
  // Predicated region
  $region18: #{tpu_custom_call.1} parent=0 // pred_check
    _
  $region19: #{tpu_custom_call.1} parent=0 // pred_check_branch
    %20 = sbr.rel (0) target = $region21
  $region20: #{tpu_custom_call.1} parent=0 // pred_region
    _
  $region21: #{tpu_custom_call.1} parent=0 // pred_fallthru
    _
  // Predicated region
  $region22: #{tpu_custom_call.1} parent=0 // pred_check
    _
  $region23: #{tpu_custom_call.1} parent=0 // pred_check_branch
    %22 = sbr.rel (0) target = $region25
  $region24: #{tpu_custom_call.1} parent=0 // pred_region
    _
  $region25: #{tpu_custom_call.1} parent=0 // pred_fallthru
    _
  %v24 = vld [vmem:[%s0] sm:$0xff]
  %v25 = vld [vmem:[%s0 + $0x8] sm:$0xff]
  %v26 = vlaneseq
  %v27 = vand.u32 %v26, 127
  %28 = vset.pattern.permute.xlu0 0
  %29 = vperm.xlu0 %28, %v24
  %v30 = vpop.permute.xlu0 %29
  %31 = vset.pattern.permute.xlu0 0
  %32 = vperm.xlu0 %31, %v25
  %v33 = vpop.permute.xlu0 %32
  %vm34 = vcmp.eq.s32.totalorder %v27, %v30
  %vm35 = vcmp.eq.s32.totalorder %v27, %v33
  %v36 = vadd.s32 %v24, 10
  %v37 = vadd.s32 %v25, 10
  %38 = vset.pattern.permute.xlu0 1
  %39 = vperm.xlu0 %38, %v36
  %v40 = vpop.permute.xlu0 %39
  %41 = vset.pattern.permute.xlu0 1
  %42 = vperm.xlu0 %41, %v37
  %v43 = vpop.permute.xlu0 %42
  %vm44 = vcmp.eq.s32.totalorder %v27, %v40
  %vm45 = vcmp.eq.s32.totalorder %v27, %v43
  %vm46 = vmor %vm34, %vm44
  %vm47 = vmor %vm35, %vm45
  %v48 = vsel %vm46, 1, 0
  %v49 = vsel %vm47, 1, 0
  %v50 = vcvt.s32.f32 %v48
  %v51 = vcvt.s32.f32 %v49
  %v52 = vpack.c.bf16 %v51, %v50
  %v53 = vld [vmem:[%s2] sm:$0xf]
  %v54 = vld [vmem:[%s2 + $0x4] sm:$0xf]
  %v55 = vld [vmem:[%s2 + $0x8] sm:$0x3]
  %v56 = vld [vmem:[%s1] sm:$0xf]
  %v57 = vld [vmem:[%s1 + $0x4] sm:$0xf]
  %v58 = vld [vmem:[%s3] sm:$0xf]
  %v59 = vld [vmem:[%s3 + $0x4] sm:$0xf]
  %v62 = vunpack.c.l.b16 %v56
  %v63 = vunpack.c.l.b16 %v57
  %v64 = vpack.c.b16 %v63, %v62
  %v67 = vunpack.c.l.b16 %v58
  %v68 = vunpack.c.l.b16 %v59
  %v69 = vpack.c.b16 %v68, %v67
  %vm71 = vcmask 130048
  %v73 = vsel %vm71, %v64, 0
  %75 = vmatpush.bf16.msra.mxu0 0
  %76 = vmatpush.bf16.msra.mxu0 0
  %77 = vmatpush.bf16.msra.mxu0 0
  %78 = vmatpush.bf16.msra.mxu0 0
  %79 = vmatpush.bf16.msra.mxu0 0
  %80 = vmatpush.bf16.msra.mxu0 0
  %81 = vmatpush.bf16.msra.mxu0 0
  %82 = vmatpush.bf16.msra.mxu0 %v69
  %83 = vmatmul.bf16.gmra.mxu0 %v73
  %v84 = vpop.f32.mrf.mxu0
  %v85 = vadd.f32 0.0, %v84
  %v86 = vpop.f32.mrf.mxu0
  %v87 = vadd.f32 0.0, %v86
  %88 = vdwg.mxu0
  %v92 = vunpack.c.l.b16 %v53
  %v93 = vunpack.c.l.b16 %v54
  %v94 = vunpack.c.l.b16 %v55
  %v95 = vpack.c.b16 %v93, %v92
  %v96 = vpack.c.b16 %v94, %v94
  %vm98 = vcmask 162816
  %v100 = vsel %vm98, %v52, 0
  %vm102 = vcmask 1041408
  %v104 = vsel %vm102, %v96, 0
  %106 = vmatpush.bf16.msra.mxu0 0
  %107 = vmatpush.bf16.msra.mxu0 0
  %108 = vmatpush.bf16.msra.mxu0 0
  %109 = vmatpush.bf16.msra.mxu0 0
  %110 = vmatpush.bf16.msra.mxu0 0
  %111 = vmatpush.bf16.msra.mxu0 0
  %112 = vmatpush.bf16.msra.mxu0 %v104
  %113 = vmatpush.bf16.msra.mxu0 %v95
  %114 = vmatmul.bf16.gmra.mxu0 %v100
  %v115 = vpop.f32.mrf.mxu0
  %v116 = vadd.f32 %v85, %v115
  %v117 = vpop.f32.mrf.mxu0
  %v118 = vadd.f32 %v87, %v117
  %119 = vdwg.mxu0
  %v120 = vmax.f32 %v116, 0.0
  %v121 = vmax.f32 %v118, 0.0
  %v122 = vpack.c.bf16 %v121, %v120
  %v123 = vld [vmem:[%s4] sm:$0xf]
  %v124 = vld [vmem:[%s4 + $0x4] sm:$0xf]
  %v125 = vld [vmem:[%s4 + $0x8] sm:$0xf]
  %v126 = vld [vmem:[%s4 + $0xc] sm:$0xf]
  %v127 = vld [vmem:[%s5] sm:$0x1]
  %v129 = vperm.slane %v127, 0
  %v135 = vunpack.c.l.b16 %v123
  %v136 = vunpack.c.l.b16 %v124
  %v137 = vunpack.c.l.b16 %v125
  %v138 = vunpack.c.l.b16 %v126
  %v139 = vpack.c.b16 %v136, %v135
  %v140 = vpack.c.b16 %v138, %v137
  %vm143 = vcmask 261120
  %v145 = vsel %vm143, %v122, 0
  %147 = vmatpush.bf16.msra.mxu0 0
  %148 = vmatpush.bf16.msra.mxu0 0
  %149 = vmatpush.bf16.msra.mxu0 0
  %150 = vmatpush.bf16.msra.mxu0 0
  %151 = vmatpush.bf16.msra.mxu0 0
  %152 = vmatpush.bf16.msra.mxu0 0
  %153 = vmatpush.bf16.msra.mxu0 %v140
  %154 = vmatpush.bf16.msra.mxu0 %v139
  %155 = vmatmul.bf16.gmra.mxu0 %v145
  %v156 = vpop.f32.mrf.mxu0
  %v157 = vadd.f32 %v129, %v156
  %v158 = vpop.f32.mrf.mxu0
  %v159 = vadd.f32 %v129, %v158
  %160 = vdwg.mxu0
  %vm161 = vcmask 31744
  %162 = vst.msk [vmem:[%s6] sm:$0xff] %vm161, %v157
  %163 = vst.msk [vmem:[%s6 + $0x8] sm:$0xff] %vm161, %v159
  // Predicated region
  $region26: #{tpu_custom_call.1} parent=0 // pred_check
    _
  $region27: #{tpu_custom_call.1} parent=0 // pred_check_branch
    %165 = sbr.rel (0) target = $region29
  $region28: #{tpu_custom_call.1} parent=0 // pred_region
    _
  $region29: #{tpu_custom_call.1} parent=0 // pred_fallthru
    _
  // Predicated region
  $region30: #{tpu_custom_call.1} parent=0 // pred_check
    _
  $region31: #{tpu_custom_call.1} parent=0 // pred_check_branch
    %167 = sbr.rel (0) target = $region33
  $region32: #{tpu_custom_call.1} parent=0 // pred_region
    _
  $region33: #{tpu_custom_call.1} parent=0 // pred_fallthru
    _

</llo_original>
